<compile_context>
chip_gen: v5e
topology: v5e:2x2
jax: 0.10.0
libtpu: 0.0.40
codegen_flags: <defaults>
</compile_context>

<pallas_src>
import functools

import jax
import jax.numpy as jnp
from jax.experimental import pallas as pl
from jax.experimental.pallas import tpu as pltpu


# ---------------------------------------------------------------------------
# Kernel: per-shard column abs-max over row tiles (resident (8, C) accumulator)
# ---------------------------------------------------------------------------
def _absmax_cols_kernel(x_ref, o_ref, *, rows_total, tile_rows, steps, need_mask):
    s = pl.program_id(0)          # shard (parallel)
    k = pl.program_id(1)          # row-tile step within shard (reduction)

    @pl.when(k == 0)
    def _():
        o_ref[...] = jnp.zeros_like(o_ref)

    a = jnp.abs(x_ref[...]).astype(jnp.float32)          # (tile_rows, C)

    if need_mask:
        # Zero rows past the true row count (padded / duplicated tail blocks).
        base = (s * steps + k) * tile_rows
        rid = jax.lax.broadcasted_iota(jnp.int32, a.shape, 0) + base
        a = jnp.where(rid < rows_total, a, 0.0)

    # Fold tile_rows -> 8 sublanes with elementwise maxes (stays on the VPU).
    part = jnp.max(a.reshape(tile_rows // 8, 8, a.shape[-1]), axis=0)  # (8, C)
    o_ref[...] = jnp.maximum(o_ref[...], part)


def _col_absmax_partials(x, *, target_tile_bytes=8 * 1024 * 1024, max_shards=2):
    """Partial per-column abs-max of 2D x (R, C) -> (num_shards * 8, C) f32.

    Caller reduces the leading axis with jnp.max to get the true abs-max.
    """
    R, C = x.shape
    itemsize = jnp.dtype(x.dtype).itemsize
    row_align = max(8, 32 // itemsize)        # f32 -> 8, bf16 -> 16, int8 -> 32

    rows_padded = ((R + row_align - 1) // row_align) * row_align
    desired = (target_tile_bytes // max(C * itemsize, 1)) // row_align * row_align
    tile_rows = int(min(max(row_align, desired), rows_padded))

    total_blocks = pl.cdiv(R, tile_rows)
    num_shards = max_shards if total_blocks >= max_shards else 1
    steps = pl.cdiv(total_blocks, num_shards)
    covered_rows = num_shards * steps * tile_rows
    need_mask = covered_rows != R             # padded / duplicated tail present

    def in_index_map(s, k):
        b = s * steps + k
        if num_shards * steps > total_blocks:
            # Extra tail blocks of the last shard re-read the last real block;
            # the in-kernel row mask zeroes their contribution.
            b = jnp.minimum(b, total_blocks - 1)
        return (b, 0)

    kern = functools.partial(
        _absmax_cols_kernel,
        rows_total=R, tile_rows=tile_rows, steps=steps, need_mask=need_mask,
    )

    return pl.pallas_call(
        kern,
        out_shape=jax.ShapeDtypeStruct((num_shards * 8, C), jnp.float32),
        grid_spec=pltpu.PrefetchScalarGridSpec(
            num_scalar_prefetch=0,
            grid=(num_shards, steps),
            in_specs=[pl.BlockSpec((tile_rows, C), in_index_map)],
            out_specs=pl.BlockSpec((8, C), lambda s, k: (s, 0)),
        ),
        compiler_params=pltpu.CompilerParams(
            dimension_semantics=("parallel", "arbitrary"),
            vmem_limit_bytes=32 * 1024 * 1024,
        ),
    )(x)


# ---------------------------------------------------------------------------
# Wrapper reproducing Migrator1DRangeSearchSQ.forward()
# ---------------------------------------------------------------------------
def migrator_1d_range_search_sq_forward(inp, weight, smooth_alpha=0.5):
    """inp: (B, N, C), weight: (O, C) -> best_scales (C,) in inp.dtype."""
    B, N, C = inp.shape
    x2d = inp.reshape(B * N, C)                     # channel-last, row-major

    act_part = _col_absmax_partials(x2d)            # (S*8, C) partial abs-max
    w_part = _col_absmax_partials(weight)           # (S*8, C) partial abs-max

    # Tiny O(C) epilogue: cross-shard max + clamp + power combine (fused by XLA).
    act_scales = jnp.max(act_part, axis=0)                       # (C,)
    weight_scales = jnp.maximum(jnp.max(w_part, axis=0), 1e-5)   # (C,)

    a = float(smooth_alpha)
    if a == 0.5:
        best = jnp.sqrt(act_scales) * jax.lax.rsqrt(weight_scales)
    else:
        # exp/log form uses 3 EUP transcendentals instead of 4 + divide;
        # guard act == 0 (post-clamp result still matches the pow path).
        best = jnp.exp(a * jnp.log(jnp.maximum(act_scales, 1e-30))
                       - (1.0 - a) * jnp.log(weight_scales))
    best = jnp.maximum(best, 1e-5)
    return best.astype(inp.dtype)

    # TODO(synk): MigratorBase.__init__ also precomputes self.output via the
    # qkv/o_proj/up/down reference paths, observers and logging; forward()
    # never uses them, so they are intentionally not reproduced here.


def _reference(inp, weight, smooth_alpha=0.5):
    cmx = inp.max(axis=(0, 1))
    cmn = inp.min(axis=(0, 1))
    act_scales = jnp.maximum(jnp.abs(cmx), jnp.abs(cmn))
    weight_scales = jnp.clip(jnp.max(jnp.abs(weight), axis=0), 1e-5, None)
    best = act_scales ** smooth_alpha / weight_scales ** (1.0 - smooth_alpha)
    return jnp.clip(best, 1e-5, None)


if __name__ == "__main__":
    key = jax.random.PRNGKey(0)
    k1, k2 = jax.random.split(key)

    B, N, C = 2, 8, 128           # small, lane-aligned hidden size
    O = 256                       # weight: (out_features, C)

    inp = jax.random.normal(k1, (B, N, C), dtype=jnp.float32)
    weight = 0.1 * jax.random.normal(k2, (O, C), dtype=jnp.float32)

    out = migrator_1d_range_search_sq_forward(inp, weight, smooth_alpha=0.5)
    out = jax.block_until_ready(out)

    ref = _reference(inp, weight, smooth_alpha=0.5)
    assert out.shape == (C,)
    assert jnp.allclose(out, ref, rtol=5e-5, atol=1e-6), "mismatch vs reference"

    print("KERNEL_OK")
</pallas_src>

<mosaic_0001>
module attributes {stable_mosaic.version = 11 : i64} {
  func.func @_absmax_cols_kernel(%arg0: i32, %arg1: i32, %arg2: memref<16x128xf32, #tpu.memory_space<vmem>>, %arg3: memref<8x128xf32, #tpu.memory_space<vmem>>) attributes {dimension_semantics = [#tpu.dimension_semantics<parallel>, #tpu.dimension_semantics<arbitrary>], iteration_bounds = array<i64: 1, 1>, scalar_prefetch = 0 : i64, scratch_operands = 0 : i64, tpu.core_type = #tpu.core_type<tc>, window_params = [{transform_indices = @transform_0, window_bounds = array<i64: 16, 128>}, {transform_indices = @transform_1, window_bounds = array<i64: 8, 128>}]} {
    %c0_i32 = arith.constant 0 : i32
    %0 = arith.cmpi eq, %arg1, %c0_i32 : i32
    %1 = arith.extui %0 : i1 to i32
    %c0_i32_0 = arith.constant 0 : i32
    %2 = arith.cmpi ne, %1, %c0_i32_0 : i32
    scf.if %2 {
      %cst_6 = arith.constant 0.000000e+00 : f32
      %10 = vector.broadcast %cst_6 : f32 to vector<8x128xf32>
      %c0_7 = arith.constant 0 : index
      %c0_8 = arith.constant 0 : index
      %11 = vector.load %arg3[%c0_7, %c0_8] : memref<8x128xf32, #tpu.memory_space<vmem>>, vector<8x128xf32>
      tpu.vector_store %arg3[%c0_7, %c0_8], %10 {strides = array<i32>} : memref<8x128xf32, #tpu.memory_space<vmem>>, vector<8x128xf32>,
    } else {
    }
    %c0 = arith.constant 0 : index
    %c0_1 = arith.constant 0 : index
    %3 = vector.load %arg2[%c0, %c0_1] : memref<16x128xf32, #tpu.memory_space<vmem>>, vector<16x128xf32>
    %4 = math.absf %3 : vector<16x128xf32>
    %5 = vector.shape_cast %4 : vector<16x128xf32> to vector<2x8x128xf32>
    %cst = arith.constant dense<0xFF800000> : vector<8x128xf32>
    %6 = vector.multi_reduction <maximumf>, %5, %cst [0] : vector<2x8x128xf32> to vector<8x128xf32>
    %c0_2 = arith.constant 0 : index
    %c0_3 = arith.constant 0 : index
    %7 = vector.load %arg3[%c0_2, %c0_3] : memref<8x128xf32, #tpu.memory_space<vmem>>, vector<8x128xf32>
    %8 = arith.maximumf %7, %6 : vector<8x128xf32>
    %c0_4 = arith.constant 0 : index
    %c0_5 = arith.constant 0 : index
    %9 = vector.load %arg3[%c0_4, %c0_5] : memref<8x128xf32, #tpu.memory_space<vmem>>, vector<8x128xf32>
    tpu.vector_store %arg3[%c0_4, %c0_5], %8 {strides = array<i32>} : memref<8x128xf32, #tpu.memory_space<vmem>>, vector<8x128xf32>,
    return
  }
  func.func @transform_0(%arg0: i32, %arg1: i32) -> (i32, i32) {
    %c1_i32 = arith.constant 1 : i32
    %0 = arith.muli %arg0, %c1_i32 : i32
    %1 = arith.addi %0, %arg1 : i32
    %c0_i32 = arith.constant 0 : i32
    %c0_i32_0 = arith.constant 0 : i32
    return %1, %c0_i32 : i32, i32
  }
  func.func @transform_1(%arg0: i32, %arg1: i32) -> (i32, i32) {
    %c0_i32 = arith.constant 0 : i32
    %c0_i32_0 = arith.constant 0 : i32
    return %arg0, %c0_i32 : i32, i32
  }
}

</mosaic_0001>

<llo_original>
// kernel: tpu_custom_call.1
$region0: #{tpu_custom_call.1}
  #allocation0 [shape = 'u32[]', space=smem, size = 0x4, offset = 0x4, fixed_abs, tag = 'smem constant byte address 0x4 - core index']
  #allocation1 [shape = 'u32[72,128]{1,0:T(1,128)}', space=vmem, size = 0x9000, scoped, tag = 'internal scratch']
  %s0 = inlined_call_operand.hbm [shape: f32[16,128], index: 0, kind: input, shape index: {}]
  %s1 = inlined_call_operand.hbm [shape: f32[8,128], index: 1, kind: output, shape index: {}]
  %s2 = sld [smem:[#allocation0]]
  $region22: #{tpu_custom_call.1} parent=0
    _
  %s4 = ssub.s32 1, %s2
  %s5 = scalar_select 0, %s4, %s2
  $region1: #{tpu_custom_call.1} parent=0
    #allocation2 [shape = 'u8[8192]{0}', space=vmem, size = 0x2000, scoped, tag = 'input window, operand 0, single buffered']
    #allocation3 [shape = 's32[1]{0}', space=sflag, size = 0x4, scoped, tag = 'scoped memory for tpu_custom_call.1']
    #allocation4 [shape = 's32[1]{0}', space=sflag, size = 0x4, scoped, tag = 'scoped memory for tpu_custom_call.1']
    #allocation5 [shape = 'u8[4096]{0}', space=vmem, size = 0x1000, scoped, tag = 'output window, operand 0, single buffered']
    %6 = vsyncpa [#allocation3], 0
    %7 = vsyncpa [#allocation4], 0
    // Predicated region
    $region2: #{tpu_custom_call.1} parent=1 // pred_check
      _
    $region3: #{tpu_custom_call.1} parent=1 // pred_check_branch
      %9 = sbr.rel (0) target = $region5
    $region4: #{tpu_custom_call.1} parent=1 // pred_region
      %s10 = sadd.s32 0, 0
      %s11 = smul.u32 2, %s10
      %13 = vsyncadd [#allocation3], 0
      %s14 = smul.addr %s11, 8
      %s15 = scalar_lea.hbm %s0, %s14
      %s16 = sshll.u32 %s15, 4
      %s17 = int_to_ptr.hbm [resolvable:$true] %s16
      %s18 = sshll.u32 [#allocation2], 4
      %s19 = int_to_ptr.vmem [resolvable:$true] %s18
      %24 = dma.hbm_to_vmem [thread:$0]  %s17, 256, %s19, [#allocation3], 128, 128, 8
    $region5: #{tpu_custom_call.1} parent=1 // pred_fallthru
      _
    // Predicated region
    $region6: #{tpu_custom_call.1} parent=1 // pred_check
      _
    $region7: #{tpu_custom_call.1} parent=1 // pred_check_branch
      %26 = sbr.rel (0) target = $region9
    $region8: #{tpu_custom_call.1} parent=1 // pred_region
      %28 = dma.done [#allocation3], 256
    $region9: #{tpu_custom_call.1} parent=1 // pred_fallthru
      _
    %s29 = sadd.s32 0, 0
    %s30 = smul.u32 2, %s29
    %p31 = scmp.eq.s32.totalorder 0, 0
    // Predicated region
    $region10: #{tpu_custom_call.1} parent=1 // pred_check
      %p32 = pneg %p31
    $region11: #{tpu_custom_call.1} parent=1 // pred_check_branch
      %34 = sbr.rel (%p32) target = $region13
    $region12: #{tpu_custom_call.1} parent=1 // pred_region
      %35 = vst [vmem:[#allocation5] sm:$0xff] 0.0
    $region13: #{tpu_custom_call.1} parent=1 // pred_fallthru
      _
    %v36 = vld [vmem:[#allocation2] sm:$0xff]
    %v37 = vld [vmem:[#allocation2 + $0x8] sm:$0xff]
    %v38 = vand.u32 2147483647, %v36
    %v39 = vand.u32 2147483647, %v37
    %v40 = vmax.f32 %v38, %v39
    %v41 = vld [vmem:[#allocation5] sm:$0xff]
    %v42 = vmax.f32 %v41, %v40
    %43 = vst [vmem:[#allocation5] sm:$0xff] %v42
    // Predicated region
    $region14: #{tpu_custom_call.1} parent=1 // pred_check
      _
    $region15: #{tpu_custom_call.1} parent=1 // pred_check_branch
      %45 = sbr.rel (0) target = $region17
    $region16: #{tpu_custom_call.1} parent=1 // pred_region
      %47 = vsyncadd [#allocation4], 0
      %s49 = sshll.u32 [#allocation5], 4
      %s50 = int_to_ptr.vmem [resolvable:$true] %s49
      %s51 = sshll.u32 %s1, 4
      %s52 = int_to_ptr.hbm [resolvable:$true] %s51
      %54 = dma.vmem_to_hbm [thread:$0]  %s50, 128, %s52, [#allocation4]
    $region17: #{tpu_custom_call.1} parent=1 // pred_fallthru
      _
    // Predicated region
    $region18: #{tpu_custom_call.1} parent=1 // pred_check
      _
    $region19: #{tpu_custom_call.1} parent=1 // pred_check_branch
      %56 = sbr.rel (0) target = $region21
    $region20: #{tpu_custom_call.1} parent=1 // pred_region
      %58 = dma.done [#allocation4], 128
    $region21: #{tpu_custom_call.1} parent=1 // pred_fallthru
      _
    %59 = vsyncpa [#allocation3], 1
    %60 = vsyncpa [#allocation4], 1

</llo_original>
